<compile_context>
chip_gen: v5e
topology: v5e:2x2
jax: 0.10.0
libtpu: 0.0.40
codegen_flags: <defaults>
</compile_context>

<pallas_src>
import jax
import jax.numpy as jnp
from jax import lax
from jax.experimental import pallas as pl
from jax.experimental.pallas import tpu as pltpu

# ----------------------------- model dims ----------------------------------
B = 2            # batch
T = 8            # sequence length (== block_size)
C = 32           # n_embd
H = 4            # n_head
HS = C // H      # head_size
FF = 4 * C       # feed-forward hidden (= 128 lanes)
EPS = 1e-5
NEG = -1e30      # finite "minus infinity" for the causal mask


def _layernorm(x, gamma, beta):
    mu = jnp.mean(x, axis=-1, keepdims=True)
    var = jnp.mean((x - mu) ** 2, axis=-1, keepdims=True)
    return (x - mu) * lax.rsqrt(var + EPS) * gamma + beta


# ------------------------------- kernel -------------------------------------
def block_kernel(x_ref, wqkvo_ref, consts_ref, w1_ref, w2_ref, o_ref):
    x = x_ref[0].astype(jnp.float32)                       # (T, C)

    # constants slab: one f32 vreg; static sublane slices (no lane shifts).
    cst = consts_ref[...]                                  # (8, 128)
    ln1_g, ln1_b = cst[0:1, :C], cst[1:2, :C]
    ln2_g, ln2_b = cst[2:3, :C], cst[3:4, :C]
    bo, b2 = cst[4:5, :C], cst[5:6, :C]
    b1 = cst[6:7, :]                                       # (1, FF)

    wslab = wqkvo_ref[...]                                 # (C, 4C) = (32, 128)

    # ---------------- self-attention branch: sa(ln1(x)) ----------------
    xn = _layernorm(x, ln1_g, ln1_b)                       # (T, C)

    # fused QKV projection: one MXU push over the full 128-lane weight slab.
    # q lanes already carry the HS**-0.5 score scale (folded at prep time);
    # the wo columns of the product (lanes 3C:4C) are simply ignored.
    qkv = jnp.dot(xn, wslab, preferred_element_type=jnp.float32)   # (T, 4C)

    # causal mask built in-kernel (VPU iota/compare fills otherwise idle slots).
    row = lax.broadcasted_iota(jnp.int32, (T, T), 0)
    col = lax.broadcasted_iota(jnp.int32, (T, T), 1)
    mask = jnp.where(row >= col, 0.0, NEG)                 # (T, T) additive

    # per-head attention via static lane slices (head axis never relayouted).
    head_outs = []
    for h in range(H):
        q_h = qkv[:, h * HS:(h + 1) * HS]                  # (T, HS)
        k_h = qkv[:, C + h * HS:C + (h + 1) * HS]          # (T, HS)
        v_h = qkv[:, 2 * C + h * HS:2 * C + (h + 1) * HS]  # (T, HS)
        s = lax.dot_general(q_h, k_h, (((1,), (1,)), ((), ())),
                            preferred_element_type=jnp.float32)  # q @ k^T
        s = s + mask
        p = jnp.exp(s - jnp.max(s, axis=-1, keepdims=True))
        w = p / jnp.sum(p, axis=-1, keepdims=True)         # exact softmax
        head_outs.append(jnp.dot(w, v_h, preferred_element_type=jnp.float32))
    att = jnp.concatenate(head_outs, axis=-1)              # (T, C)

    wo = wslab[:, 3 * C:4 * C]                             # (C, C)
    x1 = x + jnp.dot(att, wo, preferred_element_type=jnp.float32) + bo

    # ---------------- feed-forward branch: ffwd(ln2(x)) ----------------
    x2n = _layernorm(x1, ln2_g, ln2_b)
    hmid = jnp.maximum(
        jnp.dot(x2n, w1_ref[...], preferred_element_type=jnp.float32) + b1,
        0.0)                                               # (T, FF), ReLU
    ff = jnp.dot(hmid, w2_ref[...], preferred_element_type=jnp.float32) + b2

    o_ref[0] = (x1 + ff).astype(o_ref.dtype)


# --------------------- one-time parameter preparation -----------------------
def prepare_params(p):
    """Pack PyTorch-layout (out, in) params into kernel slabs. Run ONCE."""
    f32 = jnp.float32
    scale = HS ** -0.5
    # [wq*scale | wk | wv | wo], each transposed to (in, out): (C, 4C)=(32,128)
    wqkvo = jnp.concatenate(
        [p["wq"].T * scale, p["wk"].T, p["wv"].T, p["wo"].T],
        axis=1).astype(f32)

    def _row(v):
        r = jnp.zeros((128,), f32)
        return r.at[:v.shape[0]].set(v.astype(f32))

    consts = jnp.stack([
        _row(p["ln1_g"]), _row(p["ln1_b"]),
        _row(p["ln2_g"]), _row(p["ln2_b"]),
        _row(p["bo"]), _row(p["b2"]), _row(p["b1"]),
        jnp.zeros((128,), f32),
    ])                                                     # (8, 128)

    return dict(wqkvo=wqkvo, consts=consts,
                w1=p["w1"].T.astype(f32),                  # (C, FF)
                w2=p["w2"].T.astype(f32))                  # (FF, C)


# ------------------------------ wrapper --------------------------------------
def transformer_block(x, packed):
    """x: (B, T, C) float32; packed: output of prepare_params (one-time)."""
    assert x.shape == (B, T, C)
    return pl.pallas_call(
        block_kernel,
        out_shape=jax.ShapeDtypeStruct((B, T, C), x.dtype),
        grid_spec=pltpu.PrefetchScalarGridSpec(
            num_scalar_prefetch=0,
            grid=(B,),
            in_specs=[
                pl.BlockSpec((1, T, C), lambda b: (b, 0, 0)),   # x
                pl.BlockSpec((C, 4 * C), lambda b: (0, 0)),     # [wq|wk|wv|wo]
                pl.BlockSpec((8, 128), lambda b: (0, 0)),       # consts slab
                pl.BlockSpec((C, FF), lambda b: (0, 0)),        # w1^T
                pl.BlockSpec((FF, C), lambda b: (0, 0)),        # w2^T
            ],
            out_specs=pl.BlockSpec((1, T, C), lambda b: (b, 0, 0)),
        ),
        compiler_params=pltpu.CompilerParams(
            dimension_semantics=("parallel",)),            # v7x: 2 TCs
    )(x, packed["wqkvo"], packed["consts"], packed["w1"], packed["w2"])


# ----------------------------- synthetic params ------------------------------
def init_params(key):
    """Deterministic synthetic weights (PyTorch Linear layout: (out, in))."""
    ks = jax.random.split(key, 8)
    scale = 0.05
    return dict(
        ln1_g=jnp.ones((C,), jnp.float32),
        ln1_b=jnp.zeros((C,), jnp.float32),
        wq=scale * jax.random.normal(ks[0], (C, C), jnp.float32),
        wk=scale * jax.random.normal(ks[1], (C, C), jnp.float32),
        wv=scale * jax.random.normal(ks[2], (C, C), jnp.float32),
        wo=scale * jax.random.normal(ks[3], (C, C), jnp.float32),
        bo=scale * jax.random.normal(ks[4], (C,), jnp.float32),
        ln2_g=jnp.ones((C,), jnp.float32),
        ln2_b=jnp.zeros((C,), jnp.float32),
        w1=scale * jax.random.normal(ks[5], (FF, C), jnp.float32),
        b1=jnp.zeros((FF,), jnp.float32),
        w2=scale * jax.random.normal(ks[6], (C, FF), jnp.float32),
        b2=jnp.zeros((C,), jnp.float32),
    )


# ------------------------- pure-JAX reference --------------------------------
def reference_block(x, p):
    def ln(x, g, b):
        mu = jnp.mean(x, axis=-1, keepdims=True)
        var = jnp.mean((x - mu) ** 2, axis=-1, keepdims=True)
        return (x - mu) * lax.rsqrt(var + EPS) * g + b

    xn = ln(x, p["ln1_g"], p["ln1_b"])
    q = (xn @ p["wq"].T).reshape(B, T, H, HS)
    k = (xn @ p["wk"].T).reshape(B, T, H, HS)
    v = (xn @ p["wv"].T).reshape(B, T, H, HS)
    wei = jnp.einsum("bthd,bshd->bhts", q, k) * HS ** (-0.5)
    mask = jnp.tril(jnp.ones((T, T), bool))
    wei = jnp.where(mask[None, None], wei, -jnp.inf)
    wei = jax.nn.softmax(wei, axis=-1)
    att = jnp.einsum("bhts,bshd->bthd", wei, v).reshape(B, T, C)
    x1 = x + att @ p["wo"].T + p["bo"]
    x2n = ln(x1, p["ln2_g"], p["ln2_b"])
    h = jnp.maximum(x2n @ p["w1"].T + p["b1"], 0.0)
    return x1 + h @ p["w2"].T + p["b2"]


if __name__ == "__main__":
    key = jax.random.PRNGKey(0)
    kx, kp = jax.random.split(key)
    x = jax.random.normal(kx, (B, T, C), jnp.float32)
    params = init_params(kp)

    packed = prepare_params(params)          # one-time prep, outside call path
    out = jax.block_until_ready(transformer_block(x, packed))
    ref = reference_block(x, params)

    assert out.shape == (B, T, C)
    assert jnp.allclose(out, ref, atol=1e-3, rtol=1e-3), "mismatch vs reference"
    print("KERNEL_OK")
</pallas_src>

<mosaic_0001>
module attributes {stable_mosaic.version = 11 : i64} {
  func.func @block_kernel(%arg0: i32, %arg1: memref<1x8x32xf32, #tpu.memory_space<vmem>>, %arg2: memref<32x128xf32, #tpu.memory_space<vmem>>, %arg3: memref<8x128xf32, #tpu.memory_space<vmem>>, %arg4: memref<32x128xf32, #tpu.memory_space<vmem>>, %arg5: memref<128x32xf32, #tpu.memory_space<vmem>>, %arg6: memref<1x8x32xf32, #tpu.memory_space<vmem>>) attributes {dimension_semantics = [#tpu.dimension_semantics<parallel>], iteration_bounds = array<i64: 2>, scalar_prefetch = 0 : i64, scratch_operands = 0 : i64, tpu.core_type = #tpu.core_type<tc>, window_params = [{transform_indices = @transform_0, window_bounds = array<i64: 1, 8, 32>}, {pipeline_mode = #tpu.pipeline_mode<synchronous>, transform_indices = @transform_1, window_bounds = array<i64: 32, 128>}, {pipeline_mode = #tpu.pipeline_mode<synchronous>, transform_indices = @transform_2, window_bounds = array<i64: 8, 128>}, {pipeline_mode = #tpu.pipeline_mode<synchronous>, transform_indices = @transform_3, window_bounds = array<i64: 32, 128>}, {pipeline_mode = #tpu.pipeline_mode<synchronous>, transform_indices = @transform_4, window_bounds = array<i64: 128, 32>}, {transform_indices = @transform_5, window_bounds = array<i64: 1, 8, 32>}]} {
    %c0 = arith.constant 0 : index
    %c0_0 = arith.constant 0 : index
    %c0_1 = arith.constant 0 : index
    %0 = vector.load %arg1[%c0, %c0_0, %c0_1] : memref<1x8x32xf32, #tpu.memory_space<vmem>>, vector<1x8x32xf32>
    %1 = vector.shape_cast %0 : vector<1x8x32xf32> to vector<8x32xf32>
    %c0_2 = arith.constant 0 : index
    %c0_3 = arith.constant 0 : index
    %2 = vector.load %arg3[%c0_2, %c0_3] : memref<8x128xf32, #tpu.memory_space<vmem>>, vector<8x128xf32>
    %3 = vector.extract_strided_slice %2 {offsets = [0, 0], sizes = [1, 32], strides = [1, 1]} : vector<8x128xf32> to vector<1x32xf32>
    %4 = vector.extract_strided_slice %2 {offsets = [1, 0], sizes = [1, 32], strides = [1, 1]} : vector<8x128xf32> to vector<1x32xf32>
    %5 = vector.extract_strided_slice %2 {offsets = [2, 0], sizes = [1, 32], strides = [1, 1]} : vector<8x128xf32> to vector<1x32xf32>
    %6 = vector.extract_strided_slice %2 {offsets = [3, 0], sizes = [1, 32], strides = [1, 1]} : vector<8x128xf32> to vector<1x32xf32>
    %7 = vector.extract_strided_slice %2 {offsets = [4, 0], sizes = [1, 32], strides = [1, 1]} : vector<8x128xf32> to vector<1x32xf32>
    %8 = vector.extract_strided_slice %2 {offsets = [5, 0], sizes = [1, 32], strides = [1, 1]} : vector<8x128xf32> to vector<1x32xf32>
    %9 = vector.extract_strided_slice %2 {offsets = [6, 0], sizes = [1, 128], strides = [1, 1]} : vector<8x128xf32> to vector<1x128xf32>
    %c0_4 = arith.constant 0 : index
    %c0_5 = arith.constant 0 : index
    %10 = vector.load %arg2[%c0_4, %c0_5] : memref<32x128xf32, #tpu.memory_space<vmem>>, vector<32x128xf32>
    %cst = arith.constant dense<0.000000e+00> : vector<8xf32>
    %11 = vector.multi_reduction <add>, %1, %cst [1] : vector<8x32xf32> to vector<8xf32>
    %12 = vector.shape_cast %11 : vector<8xf32> to vector<8x1xf32>
    %cst_6 = arith.constant 3.200000e+01 : f32
    %13 = vector.broadcast %cst_6 : f32 to vector<8x1xf32>
    %14 = arith.divf %12, %13 : vector<8x1xf32>
    %15 = vector.broadcast %14 : vector<8x1xf32> to vector<8x32xf32>
    %16 = arith.subf %1, %15 : vector<8x32xf32>
    %17 = arith.mulf %16, %16 : vector<8x32xf32>
    %cst_7 = arith.constant dense<0.000000e+00> : vector<8xf32>
    %18 = vector.multi_reduction <add>, %17, %cst_7 [1] : vector<8x32xf32> to vector<8xf32>
    %19 = vector.shape_cast %18 : vector<8xf32> to vector<8x1xf32>
    %cst_8 = arith.constant 3.200000e+01 : f32
    %20 = vector.broadcast %cst_8 : f32 to vector<8x1xf32>
    %21 = arith.divf %19, %20 : vector<8x1xf32>
    %22 = vector.broadcast %14 : vector<8x1xf32> to vector<8x32xf32>
    %23 = arith.subf %1, %22 : vector<8x32xf32>
    %cst_9 = arith.constant 9.99999974E-6 : f32
    %24 = vector.broadcast %cst_9 : f32 to vector<8x1xf32>
    %25 = arith.addf %21, %24 : vector<8x1xf32>
    %26 = math.rsqrt %25 : vector<8x1xf32>
    %27 = vector.broadcast %26 : vector<8x1xf32> to vector<8x32xf32>
    %28 = arith.mulf %23, %27 : vector<8x32xf32>
    %29 = vector.broadcast %3 : vector<1x32xf32> to vector<8x32xf32>
    %30 = arith.mulf %28, %29 : vector<8x32xf32>
    %31 = vector.broadcast %4 : vector<1x32xf32> to vector<8x32xf32>
    %32 = arith.addf %30, %31 : vector<8x32xf32>
    %cst_10 = arith.constant dense<0.000000e+00> : vector<8x128xf32>
    %33 = tpu.matmul %32, %10, %cst_10 {dimension_numbers = #tpu.dot_dimension_numbers<[1], [0], [0], [1], [0, 0, 1, 1], [], []>} : vector<8x32xf32>, vector<32x128xf32>, vector<8x128xf32> -> vector<8x128xf32>
    %34 = tpu.iota {dimensions = array<i32: 0>} : vector<8x8xi32>
    %35 = tpu.iota {dimensions = array<i32: 1>} : vector<8x8xi32>
    %36 = arith.cmpi sge, %34, %35 : vector<8x8xi32>
    %cst_11 = arith.constant 0.000000e+00 : f32
    %cst_12 = arith.constant -1.000000e+30 : f32
    %37 = vector.broadcast %cst_11 : f32 to vector<8x8xf32>
    %38 = vector.broadcast %cst_12 : f32 to vector<8x8xf32>
    %39 = arith.select %36, %37, %38 : vector<8x8xi1>, vector<8x8xf32>
    %40 = vector.extract_strided_slice %33 {offsets = [0, 0], sizes = [8, 8], strides = [1, 1]} : vector<8x128xf32> to vector<8x8xf32>
    %41 = vector.extract_strided_slice %33 {offsets = [0, 32], sizes = [8, 8], strides = [1, 1]} : vector<8x128xf32> to vector<8x8xf32>
    %42 = vector.extract_strided_slice %33 {offsets = [0, 64], sizes = [8, 8], strides = [1, 1]} : vector<8x128xf32> to vector<8x8xf32>
    %cst_13 = arith.constant dense<0.000000e+00> : vector<8x8xf32>
    %43 = tpu.matmul %40, %41, %cst_13 {dimension_numbers = #tpu.dot_dimension_numbers<[1], [1], [0], [0], [0, 0, 1, 0], [], []>} : vector<8x8xf32>, vector<8x8xf32>, vector<8x8xf32> -> vector<8x8xf32>
    %44 = arith.addf %43, %39 : vector<8x8xf32>
    %cst_14 = arith.constant dense<0xFF800000> : vector<8xf32>
    %45 = vector.multi_reduction <maximumf>, %44, %cst_14 [1] : vector<8x8xf32> to vector<8xf32>
    %46 = vector.shape_cast %45 : vector<8xf32> to vector<8x1xf32>
    %47 = vector.broadcast %46 : vector<8x1xf32> to vector<8x8xf32>
    %48 = arith.subf %44, %47 : vector<8x8xf32>
    %49 = math.exp %48 : vector<8x8xf32>
    %cst_15 = arith.constant dense<0.000000e+00> : vector<8xf32>
    %50 = vector.multi_reduction <add>, %49, %cst_15 [1] : vector<8x8xf32> to vector<8xf32>
    %51 = vector.shape_cast %50 : vector<8xf32> to vector<8x1xf32>
    %52 = vector.broadcast %51 : vector<8x1xf32> to vector<8x8xf32>
    %53 = arith.divf %49, %52 : vector<8x8xf32>
    %cst_16 = arith.constant dense<0.000000e+00> : vector<8x8xf32>
    %54 = tpu.matmul %53, %42, %cst_16 {dimension_numbers = #tpu.dot_dimension_numbers<[1], [0], [0], [1], [0, 0, 1, 1], [], []>} : vector<8x8xf32>, vector<8x8xf32>, vector<8x8xf32> -> vector<8x8xf32>
    %55 = vector.extract_strided_slice %33 {offsets = [0, 8], sizes = [8, 8], strides = [1, 1]} : vector<8x128xf32> to vector<8x8xf32>
    %56 = vector.extract_strided_slice %33 {offsets = [0, 40], sizes = [8, 8], strides = [1, 1]} : vector<8x128xf32> to vector<8x8xf32>
    %57 = vector.extract_strided_slice %33 {offsets = [0, 72], sizes = [8, 8], strides = [1, 1]} : vector<8x128xf32> to vector<8x8xf32>
    %cst_17 = arith.constant dense<0.000000e+00> : vector<8x8xf32>
    %58 = tpu.matmul %55, %56, %cst_17 {dimension_numbers = #tpu.dot_dimension_numbers<[1], [1], [0], [0], [0, 0, 1, 0], [], []>} : vector<8x8xf32>, vector<8x8xf32>, vector<8x8xf32> -> vector<8x8xf32>
    %59 = arith.addf %58, %39 : vector<8x8xf32>
    %cst_18 = arith.constant dense<0xFF800000> : vector<8xf32>
    %60 = vector.multi_reduction <maximumf>, %59, %cst_18 [1] : vector<8x8xf32> to vector<8xf32>
    %61 = vector.shape_cast %60 : vector<8xf32> to vector<8x1xf32>
    %62 = vector.broadcast %61 : vector<8x1xf32> to vector<8x8xf32>
    %63 = arith.subf %59, %62 : vector<8x8xf32>
    %64 = math.exp %63 : vector<8x8xf32>
    %cst_19 = arith.constant dense<0.000000e+00> : vector<8xf32>
    %65 = vector.multi_reduction <add>, %64, %cst_19 [1] : vector<8x8xf32> to vector<8xf32>
    %66 = vector.shape_cast %65 : vector<8xf32> to vector<8x1xf32>
    %67 = vector.broadcast %66 : vector<8x1xf32> to vector<8x8xf32>
    %68 = arith.divf %64, %67 : vector<8x8xf32>
    %cst_20 = arith.constant dense<0.000000e+00> : vector<8x8xf32>
    %69 = tpu.matmul %68, %57, %cst_20 {dimension_numbers = #tpu.dot_dimension_numbers<[1], [0], [0], [1], [0, 0, 1, 1], [], []>} : vector<8x8xf32>, vector<8x8xf32>, vector<8x8xf32> -> vector<8x8xf32>
    %70 = vector.extract_strided_slice %33 {offsets = [0, 16], sizes = [8, 8], strides = [1, 1]} : vector<8x128xf32> to vector<8x8xf32>
    %71 = vector.extract_strided_slice %33 {offsets = [0, 48], sizes = [8, 8], strides = [1, 1]} : vector<8x128xf32> to vector<8x8xf32>
    %72 = vector.extract_strided_slice %33 {offsets = [0, 80], sizes = [8, 8], strides = [1, 1]} : vector<8x128xf32> to vector<8x8xf32>
    %cst_21 = arith.constant dense<0.000000e+00> : vector<8x8xf32>
    %73 = tpu.matmul %70, %71, %cst_21 {dimension_numbers = #tpu.dot_dimension_numbers<[1], [1], [0], [0], [0, 0, 1, 0], [], []>} : vector<8x8xf32>, vector<8x8xf32>, vector<8x8xf32> -> vector<8x8xf32>
    %74 = arith.addf %73, %39 : vector<8x8xf32>
    %cst_22 = arith.constant dense<0xFF800000> : vector<8xf32>
    %75 = vector.multi_reduction <maximumf>, %74, %cst_22 [1] : vector<8x8xf32> to vector<8xf32>
    %76 = vector.shape_cast %75 : vector<8xf32> to vector<8x1xf32>
    %77 = vector.broadcast %76 : vector<8x1xf32> to vector<8x8xf32>
    %78 = arith.subf %74, %77 : vector<8x8xf32>
    %79 = math.exp %78 : vector<8x8xf32>
    %cst_23 = arith.constant dense<0.000000e+00> : vector<8xf32>
    %80 = vector.multi_reduction <add>, %79, %cst_23 [1] : vector<8x8xf32> to vector<8xf32>
    %81 = vector.shape_cast %80 : vector<8xf32> to vector<8x1xf32>
    %82 = vector.broadcast %81 : vector<8x1xf32> to vector<8x8xf32>
    %83 = arith.divf %79, %82 : vector<8x8xf32>
    %cst_24 = arith.constant dense<0.000000e+00> : vector<8x8xf32>
    %84 = tpu.matmul %83, %72, %cst_24 {dimension_numbers = #tpu.dot_dimension_numbers<[1], [0], [0], [1], [0, 0, 1, 1], [], []>} : vector<8x8xf32>, vector<8x8xf32>, vector<8x8xf32> -> vector<8x8xf32>
    %85 = vector.extract_strided_slice %33 {offsets = [0, 24], sizes = [8, 8], strides = [1, 1]} : vector<8x128xf32> to vector<8x8xf32>
    %86 = vector.extract_strided_slice %33 {offsets = [0, 56], sizes = [8, 8], strides = [1, 1]} : vector<8x128xf32> to vector<8x8xf32>
    %87 = vector.extract_strided_slice %33 {offsets = [0, 88], sizes = [8, 8], strides = [1, 1]} : vector<8x128xf32> to vector<8x8xf32>
    %cst_25 = arith.constant dense<0.000000e+00> : vector<8x8xf32>
    %88 = tpu.matmul %85, %86, %cst_25 {dimension_numbers = #tpu.dot_dimension_numbers<[1], [1], [0], [0], [0, 0, 1, 0], [], []>} : vector<8x8xf32>, vector<8x8xf32>, vector<8x8xf32> -> vector<8x8xf32>
    %89 = arith.addf %88, %39 : vector<8x8xf32>
    %cst_26 = arith.constant dense<0xFF800000> : vector<8xf32>
    %90 = vector.multi_reduction <maximumf>, %89, %cst_26 [1] : vector<8x8xf32> to vector<8xf32>
    %91 = vector.shape_cast %90 : vector<8xf32> to vector<8x1xf32>
    %92 = vector.broadcast %91 : vector<8x1xf32> to vector<8x8xf32>
    %93 = arith.subf %89, %92 : vector<8x8xf32>
    %94 = math.exp %93 : vector<8x8xf32>
    %cst_27 = arith.constant dense<0.000000e+00> : vector<8xf32>
    %95 = vector.multi_reduction <add>, %94, %cst_27 [1] : vector<8x8xf32> to vector<8xf32>
    %96 = vector.shape_cast %95 : vector<8xf32> to vector<8x1xf32>
    %97 = vector.broadcast %96 : vector<8x1xf32> to vector<8x8xf32>
    %98 = arith.divf %94, %97 : vector<8x8xf32>
    %cst_28 = arith.constant dense<0.000000e+00> : vector<8x8xf32>
    %99 = tpu.matmul %98, %87, %cst_28 {dimension_numbers = #tpu.dot_dimension_numbers<[1], [0], [0], [1], [0, 0, 1, 1], [], []>} : vector<8x8xf32>, vector<8x8xf32>, vector<8x8xf32> -> vector<8x8xf32>
    %100 = tpu.concatenate %54, %69, %84, %99 in 1 : vector<8x8xf32>, vector<8x8xf32>, vector<8x8xf32>, vector<8x8xf32> -> vector<8x32xf32>
    %101 = vector.extract_strided_slice %10 {offsets = [0, 96], sizes = [32, 32], strides = [1, 1]} : vector<32x128xf32> to vector<32x32xf32>
    %cst_29 = arith.constant dense<0.000000e+00> : vector<8x32xf32>
    %102 = tpu.matmul %100, %101, %cst_29 {dimension_numbers = #tpu.dot_dimension_numbers<[1], [0], [0], [1], [0, 0, 1, 1], [], []>} : vector<8x32xf32>, vector<32x32xf32>, vector<8x32xf32> -> vector<8x32xf32>
    %103 = arith.addf %1, %102 : vector<8x32xf32>
    %104 = vector.broadcast %7 : vector<1x32xf32> to vector<8x32xf32>
    %105 = arith.addf %103, %104 : vector<8x32xf32>
    %cst_30 = arith.constant dense<0.000000e+00> : vector<8xf32>
    %106 = vector.multi_reduction <add>, %105, %cst_30 [1] : vector<8x32xf32> to vector<8xf32>
    %107 = vector.shape_cast %106 : vector<8xf32> to vector<8x1xf32>
    %cst_31 = arith.constant 3.200000e+01 : f32
    %108 = vector.broadcast %cst_31 : f32 to vector<8x1xf32>
    %109 = arith.divf %107, %108 : vector<8x1xf32>
    %110 = vector.broadcast %109 : vector<8x1xf32> to vector<8x32xf32>
    %111 = arith.subf %105, %110 : vector<8x32xf32>
    %112 = arith.mulf %111, %111 : vector<8x32xf32>
    %cst_32 = arith.constant dense<0.000000e+00> : vector<8xf32>
    %113 = vector.multi_reduction <add>, %112, %cst_32 [1] : vector<8x32xf32> to vector<8xf32>
    %114 = vector.shape_cast %113 : vector<8xf32> to vector<8x1xf32>
    %cst_33 = arith.constant 3.200000e+01 : f32
    %115 = vector.broadcast %cst_33 : f32 to vector<8x1xf32>
    %116 = arith.divf %114, %115 : vector<8x1xf32>
    %117 = vector.broadcast %109 : vector<8x1xf32> to vector<8x32xf32>
    %118 = arith.subf %105, %117 : vector<8x32xf32>
    %cst_34 = arith.constant 9.99999974E-6 : f32
    %119 = vector.broadcast %cst_34 : f32 to vector<8x1xf32>
    %120 = arith.addf %116, %119 : vector<8x1xf32>
    %121 = math.rsqrt %120 : vector<8x1xf32>
    %122 = vector.broadcast %121 : vector<8x1xf32> to vector<8x32xf32>
    %123 = arith.mulf %118, %122 : vector<8x32xf32>
    %124 = vector.broadcast %5 : vector<1x32xf32> to vector<8x32xf32>
    %125 = arith.mulf %123, %124 : vector<8x32xf32>
    %126 = vector.broadcast %6 : vector<1x32xf32> to vector<8x32xf32>
    %127 = arith.addf %125, %126 : vector<8x32xf32>
    %c0_35 = arith.constant 0 : index
    %c0_36 = arith.constant 0 : index
    %128 = vector.load %arg4[%c0_35, %c0_36] : memref<32x128xf32, #tpu.memory_space<vmem>>, vector<32x128xf32>
    %cst_37 = arith.constant dense<0.000000e+00> : vector<8x128xf32>
    %129 = tpu.matmul %127, %128, %cst_37 {dimension_numbers = #tpu.dot_dimension_numbers<[1], [0], [0], [1], [0, 0, 1, 1], [], []>} : vector<8x32xf32>, vector<32x128xf32>, vector<8x128xf32> -> vector<8x128xf32>
    %130 = vector.broadcast %9 : vector<1x128xf32> to vector<8x128xf32>
    %131 = arith.addf %129, %130 : vector<8x128xf32>
    %cst_38 = arith.constant 0.000000e+00 : f32
    %132 = vector.broadcast %cst_38 : f32 to vector<8x128xf32>
    %133 = arith.maximumf %131, %132 : vector<8x128xf32>
    %c0_39 = arith.constant 0 : index
    %c0_40 = arith.constant 0 : index
    %134 = vector.load %arg5[%c0_39, %c0_40] : memref<128x32xf32, #tpu.memory_space<vmem>>, vector<128x32xf32>
    %cst_41 = arith.constant dense<0.000000e+00> : vector<8x32xf32>
    %135 = tpu.matmul %133, %134, %cst_41 {dimension_numbers = #tpu.dot_dimension_numbers<[1], [0], [0], [1], [0, 0, 1, 1], [], []>} : vector<8x128xf32>, vector<128x32xf32>, vector<8x32xf32> -> vector<8x32xf32>
    %136 = vector.broadcast %8 : vector<1x32xf32> to vector<8x32xf32>
    %137 = arith.addf %135, %136 : vector<8x32xf32>
    %138 = arith.addf %105, %137 : vector<8x32xf32>
    %c0_42 = arith.constant 0 : index
    %c0_43 = arith.constant 0 : index
    %c0_44 = arith.constant 0 : index
    %139 = vector.load %arg6[%c0_42, %c0_43, %c0_44] : memref<1x8x32xf32, #tpu.memory_space<vmem>>, vector<1x8x32xf32>
    %140 = vector.shape_cast %139 : vector<1x8x32xf32> to vector<8x32xf32>
    %141 = vector.shape_cast %138 : vector<8x32xf32> to vector<1x8x32xf32>
    tpu.vector_store %arg6[%c0_42, %c0_43, %c0_44], %141 {strides = array<i32>} : memref<1x8x32xf32, #tpu.memory_space<vmem>>, vector<1x8x32xf32>,
    return
  }
  func.func @transform_0(%arg0: i32) -> (i32, i32, i32) {
    %c0_i32 = arith.constant 0 : i32
    %c0_i32_0 = arith.constant 0 : i32
    %c0_i32_1 = arith.constant 0 : i32
    return %arg0, %c0_i32, %c0_i32_0 : i32, i32, i32
  }
  func.func @transform_1(%arg0: i32) -> (i32, i32) {
    %c0_i32 = arith.constant 0 : i32
    %c0_i32_0 = arith.constant 0 : i32
    %c0_i32_1 = arith.constant 0 : i32
    return %c0_i32, %c0_i32_0 : i32, i32
  }
  func.func @transform_2(%arg0: i32) -> (i32, i32) {
    %c0_i32 = arith.constant 0 : i32
    %c0_i32_0 = arith.constant 0 : i32
    %c0_i32_1 = arith.constant 0 : i32
    return %c0_i32, %c0_i32_0 : i32, i32
  }
  func.func @transform_3(%arg0: i32) -> (i32, i32) {
    %c0_i32 = arith.constant 0 : i32
    %c0_i32_0 = arith.constant 0 : i32
    %c0_i32_1 = arith.constant 0 : i32
    return %c0_i32, %c0_i32_0 : i32, i32
  }
  func.func @transform_4(%arg0: i32) -> (i32, i32) {
    %c0_i32 = arith.constant 0 : i32
    %c0_i32_0 = arith.constant 0 : i32
    %c0_i32_1 = arith.constant 0 : i32
    return %c0_i32, %c0_i32_0 : i32, i32
  }
  func.func @transform_5(%arg0: i32) -> (i32, i32, i32) {
    %c0_i32 = arith.constant 0 : i32
    %c0_i32_0 = arith.constant 0 : i32
    %c0_i32_1 = arith.constant 0 : i32
    return %arg0, %c0_i32, %c0_i32_0 : i32, i32, i32
  }
}

</mosaic_0001>

<llo_original>
// kernel: tpu_custom_call.1
$region0: #{tpu_custom_call.1}
  #allocation0 [shape = 'u32[]', space=smem, size = 0x4, offset = 0x4, fixed_abs, tag = 'smem constant byte address 0x4 - core index']
  #allocation1 [shape = 'u32[72,128]{1,0:T(1,128)}', space=vmem, size = 0x9000, scoped, tag = 'internal scratch']
  %s0 = inlined_call_operand.vmem [shape: f32[2,8,32], index: 0, kind: input, shape index: {}]
  %s1 = inlined_call_operand.vmem [shape: f32[32,128], index: 1, kind: input, shape index: {}]
  %s2 = inlined_call_operand.vmem [shape: f32[8,128], index: 2, kind: input, shape index: {}]
  %s3 = inlined_call_operand.vmem [shape: f32[32,128], index: 3, kind: input, shape index: {}]
  %s4 = inlined_call_operand.vmem [shape: f32[128,32], index: 4, kind: input, shape index: {}]
  %s5 = inlined_call_operand.hbm [shape: f32[2,8,32], index: 5, kind: output, shape index: {}]
  %s6 = sld [smem:[#allocation0]]
  $region53: #{tpu_custom_call.1} parent=0
    _
  %s8 = ssub.s32 1, %s6
  %s9 = scalar_select 0, %s8, %s6
  $region1: #{tpu_custom_call.1} parent=0
    #allocation2 [shape = 'u8[8192]{0}', space=vmem, size = 0x2000, scoped, tag = 'output window, operand 0']
    #allocation3 [shape = 's32[2]{0}', space=sflag, size = 0x8, scoped, tag = 'scoped memory for tpu_custom_call.1']
    %10 = vsyncpa [#allocation3], 0
    %s11 = scalar_lea.sflag [#allocation3], 1
    %12 = vsyncpa %s11, 0
    loop: start=0, step=1, limit=4
    $region2: #{tpu_custom_call.1} parent=1 // loop_pre_header
      _
    $region3: #{tpu_custom_call.1} parent=1 // loop_header
      %s14 = sphi 0, %s18
      %p15 = scmp.ge.s32.totalorder %s14, 4
      %s24 = sphi 0, %s26
      %s27 = sphi 0, %s24
      %s28 = sphi 0, %s27
      %s44 = sphi 0, %s28
      %s48 = sphi 0, %s48
      %s50 = sphi 0, %s48
      %s51 = sphi 0, %s50
      %s65 = sphi 0, %s51
      %s69 = sphi 0, %s69
      %s71 = sphi 0, %s69
      %s72 = sphi 0, %s71
      %s86 = sphi 0, %s72
      %s90 = sphi 0, %s90
      %s92 = sphi 0, %s90
      %s93 = sphi 0, %s92
      %s107 = sphi 0, %s93
      %s111 = sphi 0, %s111
      %s113 = sphi 0, %s111
      %s114 = sphi 0, %s113
      %s128 = sphi 0, %s114
      %s134 = sphi 0, %s136
      %s137 = sphi 0, %s134
      %s138 = sphi 0, %s137
      %s154 = sphi 0, %s138
    $region4: #{tpu_custom_call.1} parent=1 // loop_header_branch
      %17 = sbr.rel (%p15) target = $region8
    $region5: #{tpu_custom_call.1} parent=1 // loop_body
      %s19 = ssub.s32 %s14, 1
      %s20 = ssub.s32 %s14, 2
      %s21 = sadd.s32 %s14, 1
      %s22 = ssub.s32 %s14, %s21
      %p23 = scmp.eq.s32.totalorder %s22, 0
      %s25 = sadd.s32 %s24, 1
      %s26 = scalar_select %p23, %s24, %s25
      %p29 = pneg %p23
      %p30 = scmp.eq.s32.totalorder %s14, 1
      %p31 = por %p29, %p30
      %p32 = scmp.ne.s32.totalorder %s24, %s27
      %p33 = scmp.eq.s32.totalorder %s14, 0
      %p34 = por %p32, %p33
      %p35 = scmp.ne.s32.totalorder %s24, %s27
      %p36 = scmp.eq.s32.totalorder %s19, 1
      %p37 = por %p35, %p36
      %p38 = scmp.ne.s32.totalorder %s27, %s28
      %p39 = scmp.eq.s32.totalorder %s19, 0
      %p40 = por %p38, %p39
      %p41 = scmp.ne.s32.totalorder %s27, %s28
      %p42 = scmp.eq.s32.totalorder %s20, 1
      %p43 = por %p41, %p42
      %p45 = scmp.ne.s32.totalorder %s28, %s44
      %p46 = scmp.eq.s32.totalorder %s20, 0
      %p47 = por %p45, %p46
      %s49 = sadd.s32 %s48, 1
      %p52 = scmp.eq.s32.totalorder %s14, 1
      %p53 = scmp.ne.s32.totalorder %s48, %s50
      %p54 = scmp.eq.s32.totalorder %s14, 0
      %p55 = por %p53, %p54
      %p56 = scmp.ne.s32.totalorder %s48, %s50
      %p57 = scmp.eq.s32.totalorder %s19, 1
      %p58 = por %p56, %p57
      %p59 = scmp.ne.s32.totalorder %s50, %s51
      %p60 = scmp.eq.s32.totalorder %s19, 0
      %p61 = por %p59, %p60
      %p62 = scmp.ne.s32.totalorder %s50, %s51
      %p63 = scmp.eq.s32.totalorder %s20, 1
      %p64 = por %p62, %p63
      %p66 = scmp.ne.s32.totalorder %s51, %s65
      %p67 = scmp.eq.s32.totalorder %s20, 0
      %p68 = por %p66, %p67
      %s70 = sadd.s32 %s69, 1
      %p73 = scmp.eq.s32.totalorder %s14, 1
      %p74 = scmp.ne.s32.totalorder %s69, %s71
      %p75 = scmp.eq.s32.totalorder %s14, 0
      %p76 = por %p74, %p75
      %p77 = scmp.ne.s32.totalorder %s69, %s71
      %p78 = scmp.eq.s32.totalorder %s19, 1
      %p79 = por %p77, %p78
      %p80 = scmp.ne.s32.totalorder %s71, %s72
      %p81 = scmp.eq.s32.totalorder %s19, 0
      %p82 = por %p80, %p81
      %p83 = scmp.ne.s32.totalorder %s71, %s72
      %p84 = scmp.eq.s32.totalorder %s20, 1
      %p85 = por %p83, %p84
      %p87 = scmp.ne.s32.totalorder %s72, %s86
      %p88 = scmp.eq.s32.totalorder %s20, 0
      %p89 = por %p87, %p88
      %s91 = sadd.s32 %s90, 1
      %p94 = scmp.eq.s32.totalorder %s14, 1
      %p95 = scmp.ne.s32.totalorder %s90, %s92
      %p96 = scmp.eq.s32.totalorder %s14, 0
      %p97 = por %p95, %p96
      %p98 = scmp.ne.s32.totalorder %s90, %s92
      %p99 = scmp.eq.s32.totalorder %s19, 1
      %p100 = por %p98, %p99
      %p101 = scmp.ne.s32.totalorder %s92, %s93
      %p102 = scmp.eq.s32.totalorder %s19, 0
      %p103 = por %p101, %p102
      %p104 = scmp.ne.s32.totalorder %s92, %s93
      %p105 = scmp.eq.s32.totalorder %s20, 1
      %p106 = por %p104, %p105
      %p108 = scmp.ne.s32.totalorder %s93, %s107
      %p109 = scmp.eq.s32.totalorder %s20, 0
      %p110 = por %p108, %p109
      %s112 = sadd.s32 %s111, 1
      %p115 = scmp.eq.s32.totalorder %s14, 1
      %p116 = scmp.ne.s32.totalorder %s111, %s113
      %p117 = scmp.eq.s32.totalorder %s14, 0
      %p118 = por %p116, %p117
      %p119 = scmp.ne.s32.totalorder %s111, %s113
      %p120 = scmp.eq.s32.totalorder %s19, 1
      %p121 = por %p119, %p120
      %p122 = scmp.ne.s32.totalorder %s113, %s114
      %p123 = scmp.eq.s32.totalorder %s19, 0
      %p124 = por %p122, %p123
      %p125 = scmp.ne.s32.totalorder %s113, %s114
      %p126 = scmp.eq.s32.totalorder %s20, 1
      %p127 = por %p125, %p126
      %p129 = scmp.ne.s32.totalorder %s114, %s128
      %p130 = scmp.eq.s32.totalorder %s20, 0
      %p131 = por %p129, %p130
      %s132 = ssub.s32 %s14, %s21
      %p133 = scmp.eq.s32.totalorder %s132, 0
      %s135 = sadd.s32 %s134, 1
      %s136 = scalar_select %p133, %s134, %s135
      %p139 = pneg %p133
      %p140 = scmp.eq.s32.totalorder %s14, 1
      %p141 = por %p139, %p140
      %p142 = scmp.ne.s32.totalorder %s134, %s137
      %p143 = scmp.eq.s32.totalorder %s14, 0
      %p144 = por %p142, %p143
      %p145 = scmp.ne.s32.totalorder %s134, %s137
      %p146 = scmp.eq.s32.totalorder %s19, 1
      %p147 = por %p145, %p146
      %p148 = scmp.ne.s32.totalorder %s137, %s138
      %p149 = scmp.eq.s32.totalorder %s19, 0
      %p150 = por %p148, %p149
      %p151 = scmp.ne.s32.totalorder %s137, %s138
      %p152 = scmp.eq.s32.totalorder %s20, 1
      %p153 = por %p151, %p152
      %p155 = scmp.ne.s32.totalorder %s138, %s154
      %p156 = scmp.eq.s32.totalorder %s20, 0
      %p157 = por %p155, %p156
      %p158 = scmp.le.s32.totalorder 1, %s14
      %p159 = scmp.lt.s32.totalorder %s14, 3
      %p160 = pnand %p158, %p159
      %p161 = pneg %p160
      // Predicated region
      $region9: #{tpu_custom_call.1} parent=5 // pred_check
        _
      $region10: #{tpu_custom_call.1} parent=5 // pred_check_branch
        %163 = sbr.rel (%p160) target = $region12
      $region11: #{tpu_custom_call.1} parent=5 // pred_region
        %s164 = ssub.s32 %s14, 1
        // Predicated region
        $region13: #{tpu_custom_call.1} parent=11 // pred_check
          %p165 = pneg %p61
        $region14: #{tpu_custom_call.1} parent=11 // pred_check_branch
          %167 = sbr.rel (%p165) target = $region16
        $region15: #{tpu_custom_call.1} parent=11 // pred_region
          _
        $region16: #{tpu_custom_call.1} parent=11 // pred_fallthru
          _
        // Predicated region
        $region17: #{tpu_custom_call.1} parent=11 // pred_check
          %p168 = pneg %p82
        $region18: #{tpu_custom_call.1} parent=11 // pred_check_branch
          %170 = sbr.rel (%p168) target = $region20
        $region19: #{tpu_custom_call.1} parent=11 // pred_region
          _
        $region20: #{tpu_custom_call.1} parent=11 // pred_fallthru
          _
        // Predicated region
        $region21: #{tpu_custom_call.1} parent=11 // pred_check
          %p171 = pneg %p103
        $region22: #{tpu_custom_call.1} parent=11 // pred_check_branch
          %173 = sbr.rel (%p171) target = $region24
        $region23: #{tpu_custom_call.1} parent=11 // pred_region
          _
        $region24: #{tpu_custom_call.1} parent=11 // pred_fallthru
          _
        // Predicated region
        $region25: #{tpu_custom_call.1} parent=11 // pred_check
          %p174 = pneg %p124
        $region26: #{tpu_custom_call.1} parent=11 // pred_check_branch
          %176 = sbr.rel (%p174) target = $region28
        $region27: #{tpu_custom_call.1} parent=11 // pred_region
          _
        $region28: #{tpu_custom_call.1} parent=11 // pred_fallthru
          _
      $region12: #{tpu_custom_call.1} parent=5 // pred_fallthru
        _
      %p177 = scmp.lt.s32.totalorder %s14, 2
      // Predicated region
      $region29: #{tpu_custom_call.1} parent=5 // pred_check
        %p178 = pneg %p177
      $region30: #{tpu_custom_call.1} parent=5 // pred_check_branch
        %180 = sbr.rel (%p178) target = $region32
      $region31: #{tpu_custom_call.1} parent=5 // pred_region
        // Predicated region
        $region33: #{tpu_custom_call.1} parent=31 // pred_check
          %p181 = pneg %p34
        $region34: #{tpu_custom_call.1} parent=31 // pred_check_branch
          %183 = sbr.rel (%p181) target = $region36
        $region35: #{tpu_custom_call.1} parent=31 // pred_region
          %p184 = scmp.lt.s32.totalorder %s14, 1
          %s185 = scalar_select %p184, %s14, 1
          %s186 = smul.addr %s185, 8
          %s187 = scalar_lea.vmem %s0, %s186
        $region36: #{tpu_custom_call.1} parent=31 // pred_fallthru
          _
      $region32: #{tpu_custom_call.1} parent=5 // pred_fallthru
        _
      %p188 = scmp.le.s32.totalorder 1, %s14
      %p189 = scmp.lt.s32.totalorder %s14, 3
      %p190 = pnand %p188, %p189
      %p191 = pneg %p190
      // Predicated region
      $region37: #{tpu_custom_call.1} parent=5 // pred_check
        _
      $region38: #{tpu_custom_call.1} parent=5 // pred_check_branch
        %193 = sbr.rel (%p190) target = $region40
      $region39: #{tpu_custom_call.1} parent=5 // pred_region
        %s194 = ssub.s32 %s14, 1
        %p195 = scmp.lt.s32.totalorder %s19, 1
        %s196 = scalar_select %p195, %s19, 1
        %s197 = smul.addr %s196, 8
        %s198 = scalar_lea.vmem %s0, %s197
        %p199 = pneg %p40
        %p200 = pneg %p37
        %p201 = pneg %p61
        %p202 = pneg %p58
        %p203 = pneg %p82
        %p204 = pneg %p79
        %p205 = pneg %p103
        %p206 = pneg %p100
        %p207 = pneg %p124
        %p208 = pneg %p121
        %p209 = pneg %p150
        %p210 = pneg %p147
        %s211 = sand.u32 %s137, 1
        %s212 = scalar_lea.sflag [#allocation3], %s211
        %s213 = sand.u32 %s137, 1
        %s214 = smul.addr %s213, 8
        %s215 = scalar_lea.vmem [#allocation2], %s214
        %p216 = scmp.lt.s32.totalorder %s19, 1
        %s217 = scalar_select %p216, %s19, 1
        %s218 = smul.addr %s217, 8
        %s219 = scalar_lea.vmem %s0, %s218
        %v220 = vld [vmem:[%s219] sm:$0xff]
        %v221 = vld [vmem:[%s2] sm:$0xff]
        %v222 = vld [vmem:[%s1] sm:$0xff]
        %v223 = vld [vmem:[%s1 + $0x8] sm:$0xff]
        %v224 = vld [vmem:[%s1 + $0x10] sm:$0xff]
        %v225 = vld [vmem:[%s1 + $0x18] sm:$0xff]
        %vm226 = vcmask 261120
        %v227 = vsel %vm226, %v220, 0.0
        %228 = vadd.xlane.f32.xlu0 %v227
        %v229 = vpop.xlane.xlu0 %228
        %v230 = vrcp.pop 32.0
        %v231 = vmul.f32 32.0, %v230
        %v232 = vsub.f32 1.0, %v231
        %v233 = vmul.f32 %v230, %v232
        %v234 = vadd.f32 %v230, %v233
        %vm235 = vweird.f32 %v230
        %v236 = vsel %vm235, %v230, %v234
        %v237 = vmul.f32 %v229, %v236
        %v238 = vsub.f32 %v220, %v237
        %v239 = vmul.f32 %v238, %v238
        %v240 = vsel %vm226, %v239, 0.0
        %241 = vadd.xlane.f32.xlu0 %v240
        %v242 = vpop.xlane.xlu0 %241
        %v243 = vmul.f32 %v242, %v236
        %v244 = vadd.f32 %v243, 1e-05
        %v245 = vrsqrt.pop %v244
        %v246 = vmul.f32 %v245, %v244
        %v247 = vmul.f32 %v246, %v245
        %v248 = vmul.f32 0.5, %v247
        %v249 = vsub.f32 1.5, %v248
        %v250 = vmul.f32 %v245, %v249
        %vm251 = vweird.f32 %v244
        %vm252 = vweird.f32 %v245
        %vm253 = vmor %vm251, %vm252
        %v254 = vsel %vm253, %v245, %v250
        %v255 = vmul.f32 %v238, %v254
        %v256 = vperm.slane %v221, 0
        %v257 = vmul.f32 %v255, %v256
        %v258 = vperm.slane %v221, 1
        %v259 = vadd.f32 %v257, %v258
        %v261 = vsel %vm226, %v259, 0
        %263 = vmatpush.msra.mxu0 0.0
        %264 = vmatpush.msra.mxu0 0.0
        %265 = vmatpush.msra.mxu0 0.0
        %266 = vmatpush.msra.mxu0 0.0
        %267 = vmatpush.msra.mxu0 0.0
        %268 = vmatpush.msra.mxu0 0.0
        %269 = vmatpush.msra.mxu0 0.0
        %270 = vmatpush.msra.mxu0 0.0
        %271 = vmatpush.msra.mxu0 0.0
        %272 = vmatpush.msra.mxu0 0.0
        %273 = vmatpush.msra.mxu0 0.0
        %274 = vmatpush.msra.mxu0 0.0
        %275 = vmatpush.msra.mxu0 %v225
        %276 = vmatpush.msra.mxu0 %v224
        %277 = vmatpush.msra.mxu0 %v223
        %278 = vmatpush.msra.mxu0 %v222
        %279 = vmatmul.f32.gmra.mxu0 %v261
        %v280 = vpop.f32.mrf.mxu0
        %v281 = vadd.f32 0.0, %v280
        %282 = vdwg.mxu0
        %v283 = vlaneseq
        %v284 = vshrl.u32 %v283, 7
        %v285 = vlaneseq
        %v286 = vand.u32 %v285, 127
        %vm287 = vcmp.ge.s32.totalorder %v284, %v286
        %v288 = vsel %vm287, 0.0, -1e+30
        %290 = vrot.lane.b32.xlu0 %v281, 96
        %v291 = vpop.permute.xlu0 %290
        %vm292 = vcmask 64512
        %v293 = vsel %vm292, %v281, 0
        %v295 = vsel %vm292, %v291, 0
        %297 = vmatpush.xpose.msra.mxu0 0.0
        %298 = vmatpush.xpose.msra.mxu0 0.0
        %299 = vmatpush.xpose.msra.mxu0 0.0
        %300 = vmatpush.xpose.msra.mxu0 0.0
        %301 = vmatpush.xpose.msra.mxu0 0.0
        %302 = vmatpush.xpose.msra.mxu0 0.0
        %303 = vmatpush.xpose.msra.mxu0 0.0
        %304 = vmatpush.xpose.msra.mxu0 0.0
        %305 = vmatpush.xpose.msra.mxu0 0.0
        %306 = vmatpush.xpose.msra.mxu0 0.0
        %307 = vmatpush.xpose.msra.mxu0 0.0
        %308 = vmatpush.xpose.msra.mxu0 0.0
        %309 = vmatpush.xpose.msra.mxu0 0.0
        %310 = vmatpush.xpose.msra.mxu0 0.0
        %311 = vmatpush.xpose.msra.mxu0 0.0
        %312 = vmatpush.xpose.msra.mxu0 %v295
        %313 = vmatmul.f32.gmra.mxu0 %v293
        %v314 = vpop.f32.mrf.mxu0
        %v315 = vadd.f32 %v288, %v314
        %316 = vdwg.mxu0
        %v317 = vsel %vm292, %v315, -inf
        %318 = vmax.xlane.f32.xlu0 %v317
        %v319 = vpop.xlane.xlu0 %318
        %v320 = vsub.f32 %v315, %v319
        %v321 = vmul.f32 %v320, 1.442695
        %v322 = vpow.pop %v321
        %v323 = vsel %vm292, %v322, 0.0
        %324 = vadd.xlane.f32.xlu0 %v323
        %v325 = vpop.xlane.xlu0 %324
        %v326 = vrcp.pop %v325
        %v327 = vmul.f32 %v325, %v326
        %v328 = vsub.f32 1.0, %v327
        %v329 = vmul.f32 %v326, %v328
        %v330 = vadd.f32 %v326, %v329
        %vm331 = vweird.f32 %v325
        %vm332 = vweird.f32 %v326
        %vm333 = vmor %vm331, %vm332
        %v334 = vsel %vm333, %v326, %v330
        %v335 = vand.u32 2147483647, %v325
        %vm336 = vcmp.eq.f32.partialorder %v335, 8.507059e+37
        %v337 = vand.u32 %v325, 2147483648
        %v338 = vor.u32 1.1754944e-38, %v337
        %v339 = vsel %vm336, %v338, %v334
        %v340 = vmul.f32 %v322, %v339
        %341 = vrot.lane.b32.xlu0 %v281, 64
        %v342 = vpop.permute.xlu0 %341
        %v345 = vsel %vm292, %v340, 0
        %347 = vmatpush.msra.mxu0 0.0
        %348 = vmatpush.msra.mxu0 0.0
        %349 = vmatpush.msra.mxu0 0.0
        %350 = vmatpush.msra.mxu0 0.0
        %351 = vmatpush.msra.mxu0 0.0
        %352 = vmatpush.msra.mxu0 0.0
        %353 = vmatpush.msra.mxu0 0.0
        %354 = vmatpush.msra.mxu0 0.0
        %355 = vmatpush.msra.mxu0 0.0
        %356 = vmatpush.msra.mxu0 0.0
        %357 = vmatpush.msra.mxu0 0.0
        %358 = vmatpush.msra.mxu0 0.0
        %359 = vmatpush.msra.mxu0 0.0
        %360 = vmatpush.msra.mxu0 0.0
        %361 = vmatpush.msra.mxu0 0.0
        %362 = vmatpush.msra.mxu0 %v342
        %363 = vmatmul.f32.gmra.mxu0 %v345
        %v364 = vpop.f32.mrf.mxu0
        %v365 = vadd.f32 0.0, %v364
        %366 = vdwg.mxu0
        %367 = vrot.lane.b32.xlu0 %v281, 120
        %v368 = vpop.permute.xlu0 %367
        %369 = vrot.lane.b32.xlu0 %v281, 88
        %v370 = vpop.permute.xlu0 %369
        %v371 = vsel %vm292, %v368, 0
        %v373 = vsel %vm292, %v370, 0
        %375 = vmatpush.xpose.msra.mxu0 0.0
        %376 = vmatpush.xpose.msra.mxu0 0.0
        %377 = vmatpush.xpose.msra.mxu0 0.0
        %378 = vmatpush.xpose.msra.mxu0 0.0
        %379 = vmatpush.xpose.msra.mxu0 0.0
        %380 = vmatpush.xpose.msra.mxu0 0.0
        %381 = vmatpush.xpose.msra.mxu0 0.0
        %382 = vmatpush.xpose.msra.mxu0 0.0
        %383 = vmatpush.xpose.msra.mxu0 0.0
        %384 = vmatpush.xpose.msra.mxu0 0.0
        %385 = vmatpush.xpose.msra.mxu0 0.0
        %386 = vmatpush.xpose.msra.mxu0 0.0
        %387 = vmatpush.xpose.msra.mxu0 0.0
        %388 = vmatpush.xpose.msra.mxu0 0.0
        %389 = vmatpush.xpose.msra.mxu0 0.0
        %390 = vmatpush.xpose.msra.mxu0 %v373
        %391 = vmatmul.f32.gmra.mxu0 %v371
        %v392 = vpop.f32.mrf.mxu0
        %v393 = vadd.f32 %v288, %v392
        %394 = vdwg.mxu0
        %v395 = vsel %vm292, %v393, -inf
        %396 = vmax.xlane.f32.xlu0 %v395
        %v397 = vpop.xlane.xlu0 %396
        %v398 = vsub.f32 %v393, %v397
        %v399 = vmul.f32 %v398, 1.442695
        %v400 = vpow.pop %v399
        %v401 = vsel %vm292, %v400, 0.0
        %402 = vadd.xlane.f32.xlu0 %v401
        %v403 = vpop.xlane.xlu0 %402
        %v404 = vrcp.pop %v403
        %v405 = vmul.f32 %v403, %v404
        %v406 = vsub.f32 1.0, %v405
        %v407 = vmul.f32 %v404, %v406
        %v408 = vadd.f32 %v404, %v407
        %vm409 = vweird.f32 %v403
        %vm410 = vweird.f32 %v404
        %vm411 = vmor %vm409, %vm410
        %v412 = vsel %vm411, %v404, %v408
        %v413 = vand.u32 2147483647, %v403
        %vm414 = vcmp.eq.f32.partialorder %v413, 8.507059e+37
        %v415 = vand.u32 %v403, 2147483648
        %v416 = vor.u32 1.1754944e-38, %v415
        %v417 = vsel %vm414, %v416, %v412
        %v418 = vmul.f32 %v400, %v417
        %419 = vrot.lane.b32.xlu0 %v281, 56
        %v420 = vpop.permute.xlu0 %419
        %v423 = vsel %vm292, %v418, 0
        %425 = vmatpush.msra.mxu0 0.0
        %426 = vmatpush.msra.mxu0 0.0
        %427 = vmatpush.msra.mxu0 0.0
        %428 = vmatpush.msra.mxu0 0.0
        %429 = vmatpush.msra.mxu0 0.0
        %430 = vmatpush.msra.mxu0 0.0
        %431 = vmatpush.msra.mxu0 0.0
        %432 = vmatpush.msra.mxu0 0.0
        %433 = vmatpush.msra.mxu0 0.0
        %434 = vmatpush.msra.mxu0 0.0
        %435 = vmatpush.msra.mxu0 0.0
        %436 = vmatpush.msra.mxu0 0.0
        %437 = vmatpush.msra.mxu0 0.0
        %438 = vmatpush.msra.mxu0 0.0
        %439 = vmatpush.msra.mxu0 0.0
        %440 = vmatpush.msra.mxu0 %v420
        %441 = vmatmul.f32.gmra.mxu0 %v423
        %v442 = vpop.f32.mrf.mxu0
        %v443 = vadd.f32 0.0, %v442
        %444 = vdwg.mxu0
        %445 = vrot.lane.b32.xlu0 %v281, 112
        %v446 = vpop.permute.xlu0 %445
        %447 = vrot.lane.b32.xlu0 %v281, 80
        %v448 = vpop.permute.xlu0 %447
        %v449 = vsel %vm292, %v446, 0
        %v451 = vsel %vm292, %v448, 0
        %453 = vmatpush.xpose.msra.mxu0 0.0
        %454 = vmatpush.xpose.msra.mxu0 0.0
        %455 = vmatpush.xpose.msra.mxu0 0.0
        %456 = vmatpush.xpose.msra.mxu0 0.0
        %457 = vmatpush.xpose.msra.mxu0 0.0
        %458 = vmatpush.xpose.msra.mxu0 0.0
        %459 = vmatpush.xpose.msra.mxu0 0.0
        %460 = vmatpush.xpose.msra.mxu0 0.0
        %461 = vmatpush.xpose.msra.mxu0 0.0
        %462 = vmatpush.xpose.msra.mxu0 0.0
        %463 = vmatpush.xpose.msra.mxu0 0.0
        %464 = vmatpush.xpose.msra.mxu0 0.0
        %465 = vmatpush.xpose.msra.mxu0 0.0
        %466 = vmatpush.xpose.msra.mxu0 0.0
        %467 = vmatpush.xpose.msra.mxu0 0.0
        %468 = vmatpush.xpose.msra.mxu0 %v451
        %469 = vmatmul.f32.gmra.mxu0 %v449
        %v470 = vpop.f32.mrf.mxu0
        %v471 = vadd.f32 %v288, %v470
        %472 = vdwg.mxu0
        %v473 = vsel %vm292, %v471, -inf
        %474 = vmax.xlane.f32.xlu0 %v473
        %v475 = vpop.xlane.xlu0 %474
        %v476 = vsub.f32 %v471, %v475
        %v477 = vmul.f32 %v476, 1.442695
        %v478 = vpow.pop %v477
        %v479 = vsel %vm292, %v478, 0.0
        %480 = vadd.xlane.f32.xlu0 %v479
        %v481 = vpop.xlane.xlu0 %480
        %v482 = vrcp.pop %v481
        %v483 = vmul.f32 %v481, %v482
        %v484 = vsub.f32 1.0, %v483
        %v485 = vmul.f32 %v482, %v484
        %v486 = vadd.f32 %v482, %v485
        %vm487 = vweird.f32 %v481
        %vm488 = vweird.f32 %v482
        %vm489 = vmor %vm487, %vm488
        %v490 = vsel %vm489, %v482, %v486
        %v491 = vand.u32 2147483647, %v481
        %vm492 = vcmp.eq.f32.partialorder %v491, 8.507059e+37
        %v493 = vand.u32 %v481, 2147483648
        %v494 = vor.u32 1.1754944e-38, %v493
        %v495 = vsel %vm492, %v494, %v490
        %v496 = vmul.f32 %v478, %v495
        %497 = vrot.lane.b32.xlu0 %v281, 48
        %v498 = vpop.permute.xlu0 %497
        %v501 = vsel %vm292, %v496, 0
        %503 = vmatpush.msra.mxu0 0.0
        %504 = vmatpush.msra.mxu0 0.0
        %505 = vmatpush.msra.mxu0 0.0
        %506 = vmatpush.msra.mxu0 0.0
        %507 = vmatpush.msra.mxu0 0.0
        %508 = vmatpush.msra.mxu0 0.0
        %509 = vmatpush.msra.mxu0 0.0
        %510 = vmatpush.msra.mxu0 0.0
        %511 = vmatpush.msra.mxu0 0.0
        %512 = vmatpush.msra.mxu0 0.0
        %513 = vmatpush.msra.mxu0 0.0
        %514 = vmatpush.msra.mxu0 0.0
        %515 = vmatpush.msra.mxu0 0.0
        %516 = vmatpush.msra.mxu0 0.0
        %517 = vmatpush.msra.mxu0 0.0
        %518 = vmatpush.msra.mxu0 %v498
        %519 = vmatmul.f32.gmra.mxu0 %v501
        %v520 = vpop.f32.mrf.mxu0
        %v521 = vadd.f32 0.0, %v520
        %522 = vdwg.mxu0
        %523 = vrot.lane.b32.xlu0 %v281, 104
        %v524 = vpop.permute.xlu0 %523
        %525 = vrot.lane.b32.xlu0 %v281, 72
        %v526 = vpop.permute.xlu0 %525
        %v527 = vsel %vm292, %v524, 0
        %v529 = vsel %vm292, %v526, 0
        %531 = vmatpush.xpose.msra.mxu0 0.0
        %532 = vmatpush.xpose.msra.mxu0 0.0
        %533 = vmatpush.xpose.msra.mxu0 0.0
        %534 = vmatpush.xpose.msra.mxu0 0.0
        %535 = vmatpush.xpose.msra.mxu0 0.0
        %536 = vmatpush.xpose.msra.mxu0 0.0
        %537 = vmatpush.xpose.msra.mxu0 0.0
        %538 = vmatpush.xpose.msra.mxu0 0.0
        %539 = vmatpush.xpose.msra.mxu0 0.0
        %540 = vmatpush.xpose.msra.mxu0 0.0
        %541 = vmatpush.xpose.msra.mxu0 0.0
        %542 = vmatpush.xpose.msra.mxu0 0.0
        %543 = vmatpush.xpose.msra.mxu0 0.0
        %544 = vmatpush.xpose.msra.mxu0 0.0
        %545 = vmatpush.xpose.msra.mxu0 0.0
        %546 = vmatpush.xpose.msra.mxu0 %v529
        %547 = vmatmul.f32.gmra.mxu0 %v527
        %v548 = vpop.f32.mrf.mxu0
        %v549 = vadd.f32 %v288, %v548
        %550 = vdwg.mxu0
        %v551 = vsel %vm292, %v549, -inf
        %552 = vmax.xlane.f32.xlu0 %v551
        %v553 = vpop.xlane.xlu0 %552
        %v554 = vsub.f32 %v549, %v553
        %v555 = vmul.f32 %v554, 1.442695
        %v556 = vpow.pop %v555
        %v557 = vsel %vm292, %v556, 0.0
        %558 = vadd.xlane.f32.xlu0 %v557
        %v559 = vpop.xlane.xlu0 %558
        %v560 = vrcp.pop %v559
        %v561 = vmul.f32 %v559, %v560
        %v562 = vsub.f32 1.0, %v561
        %v563 = vmul.f32 %v560, %v562
        %v564 = vadd.f32 %v560, %v563
        %vm565 = vweird.f32 %v559
        %vm566 = vweird.f32 %v560
        %vm567 = vmor %vm565, %vm566
        %v568 = vsel %vm567, %v560, %v564
        %v569 = vand.u32 2147483647, %v559
        %vm570 = vcmp.eq.f32.partialorder %v569, 8.507059e+37
        %v571 = vand.u32 %v559, 2147483648
        %v572 = vor.u32 1.1754944e-38, %v571
        %v573 = vsel %vm570, %v572, %v568
        %v574 = vmul.f32 %v556, %v573
        %575 = vrot.lane.b32.xlu0 %v281, 40
        %v576 = vpop.permute.xlu0 %575
        %v579 = vsel %vm292, %v574, 0
        %581 = vmatpush.msra.mxu0 0.0
        %582 = vmatpush.msra.mxu0 0.0
        %583 = vmatpush.msra.mxu0 0.0
        %584 = vmatpush.msra.mxu0 0.0
        %585 = vmatpush.msra.mxu0 0.0
        %586 = vmatpush.msra.mxu0 0.0
        %587 = vmatpush.msra.mxu0 0.0
        %588 = vmatpush.msra.mxu0 0.0
        %589 = vmatpush.msra.mxu0 0.0
        %590 = vmatpush.msra.mxu0 0.0
        %591 = vmatpush.msra.mxu0 0.0
        %592 = vmatpush.msra.mxu0 0.0
        %593 = vmatpush.msra.mxu0 0.0
        %594 = vmatpush.msra.mxu0 0.0
        %595 = vmatpush.msra.mxu0 0.0
        %596 = vmatpush.msra.mxu0 %v576
        %597 = vmatmul.f32.gmra.mxu0 %v579
        %v598 = vpop.f32.mrf.mxu0
        %v599 = vadd.f32 0.0, %v598
        %600 = vdwg.mxu0
        %602 = vrot.lane.b32.xlu0 %v443, 8
        %v603 = vpop.permute.xlu0 %602
        %606 = vrot.lane.b32.xlu0 %v521, 16
        %v607 = vpop.permute.xlu0 %606
        %610 = vrot.lane.b32.xlu0 %v599, 24
        %v611 = vpop.permute.xlu0 %610
        %v613 = vsel %vm292, %v365, %v603
        %vm614 = vcmask 130048
        %v615 = vsel %vm614, %v613, %v607
        %vm616 = vcmask 195584
        %v617 = vsel %vm616, %v615, %v611
        %622 = vrot.lane.b32.xlu0 %v222, 32
        %v623 = vpop.permute.xlu0 %622
        %624 = vrot.lane.b32.xlu0 %v223, 32
        %v625 = vpop.permute.xlu0 %624
        %626 = vrot.lane.b32.xlu0 %v224, 32
        %v627 = vpop.permute.xlu0 %626
        %628 = vrot.lane.b32.xlu0 %v225, 32
        %v629 = vpop.permute.xlu0 %628
        %v635 = vsel %vm226, %v617, 0
        %637 = vmatpush.msra.mxu0 0.0
        %638 = vmatpush.msra.mxu0 0.0
        %639 = vmatpush.msra.mxu0 0.0
        %640 = vmatpush.msra.mxu0 0.0
        %641 = vmatpush.msra.mxu0 0.0
        %642 = vmatpush.msra.mxu0 0.0
        %643 = vmatpush.msra.mxu0 0.0
        %644 = vmatpush.msra.mxu0 0.0
        %645 = vmatpush.msra.mxu0 0.0
        %646 = vmatpush.msra.mxu0 0.0
        %647 = vmatpush.msra.mxu0 0.0
        %648 = vmatpush.msra.mxu0 0.0
        %649 = vmatpush.msra.mxu0 %v629
        %650 = vmatpush.msra.mxu0 %v627
        %651 = vmatpush.msra.mxu0 %v625
        %652 = vmatpush.msra.mxu0 %v623
        %653 = vmatmul.f32.gmra.mxu0 %v635
        %v654 = vpop.f32.mrf.mxu0
        %v655 = vadd.f32 0.0, %v654
        %656 = vdwg.mxu0
        %v657 = vadd.f32 %v220, %v655
        %v658 = vperm.slane %v221, 4
        %v659 = vadd.f32 %v657, %v658
        %v660 = vsel %vm226, %v659, 0.0
        %661 = vadd.xlane.f32.xlu0 %v660
        %v662 = vpop.xlane.xlu0 %661
        %v663 = vmul.f32 %v662, %v236
        %v664 = vsub.f32 %v659, %v663
        %v665 = vmul.f32 %v664, %v664
        %v666 = vsel %vm226, %v665, 0.0
        %667 = vadd.xlane.f32.xlu0 %v666
        %v668 = vpop.xlane.xlu0 %667
        %v669 = vmul.f32 %v668, %v236
        %v670 = vadd.f32 %v669, 1e-05
        %v671 = vrsqrt.pop %v670
        %v672 = vmul.f32 %v671, %v670
        %v673 = vmul.f32 %v672, %v671
        %v674 = vmul.f32 0.5, %v673
        %v675 = vsub.f32 1.5, %v674
        %v676 = vmul.f32 %v671, %v675
        %vm677 = vweird.f32 %v670
        %vm678 = vweird.f32 %v671
        %vm679 = vmor %vm677, %vm678
        %v680 = vsel %vm679, %v671, %v676
        %v681 = vmul.f32 %v664, %v680
        %v682 = vperm.slane %v221, 2
        %v683 = vmul.f32 %v681, %v682
        %v684 = vperm.slane %v221, 3
        %v685 = vadd.f32 %v683, %v684
        %v686 = vld [vmem:[%s3] sm:$0xff]
        %v687 = vld [vmem:[%s3 + $0x8] sm:$0xff]
        %v688 = vld [vmem:[%s3 + $0x10] sm:$0xff]
        %v689 = vld [vmem:[%s3 + $0x18] sm:$0xff]
        %v690 = vperm.slane %v221, 6
        %v692 = vsel %vm226, %v685, 0
        %694 = vmatpush.msra.mxu0 0.0
        %695 = vmatpush.msra.mxu0 0.0
        %696 = vmatpush.msra.mxu0 0.0
        %697 = vmatpush.msra.mxu0 0.0
        %698 = vmatpush.msra.mxu0 0.0
        %699 = vmatpush.msra.mxu0 0.0
        %700 = vmatpush.msra.mxu0 0.0
        %701 = vmatpush.msra.mxu0 0.0
        %702 = vmatpush.msra.mxu0 0.0
        %703 = vmatpush.msra.mxu0 0.0
        %704 = vmatpush.msra.mxu0 0.0
        %705 = vmatpush.msra.mxu0 0.0
        %706 = vmatpush.msra.mxu0 %v689
        %707 = vmatpush.msra.mxu0 %v688
        %708 = vmatpush.msra.mxu0 %v687
        %709 = vmatpush.msra.mxu0 %v686
        %710 = vmatmul.f32.gmra.mxu0 %v692
        %v711 = vpop.f32.mrf.mxu0
        %v712 = vadd.f32 %v690, %v711
        %713 = vdwg.mxu0
        %v714 = vmax.f32 %v712, 0.0
        %v715 = vld [vmem:[%s4] sm:$0xff]
        %v716 = vld [vmem:[%s4 + $0x8] sm:$0xff]
        %v717 = vld [vmem:[%s4 + $0x10] sm:$0xff]
        %v718 = vld [vmem:[%s4 + $0x18] sm:$0xff]
        %v719 = vld [vmem:[%s4 + $0x20] sm:$0xff]
        %v720 = vld [vmem:[%s4 + $0x28] sm:$0xff]
        %v721 = vld [vmem:[%s4 + $0x30] sm:$0xff]
        %v722 = vld [vmem:[%s4 + $0x38] sm:$0xff]
        %v723 = vld [vmem:[%s4 + $0x40] sm:$0xff]
        %v724 = vld [vmem:[%s4 + $0x48] sm:$0xff]
        %v725 = vld [vmem:[%s4 + $0x50] sm:$0xff]
        %v726 = vld [vmem:[%s4 + $0x58] sm:$0xff]
        %v727 = vld [vmem:[%s4 + $0x60] sm:$0xff]
        %v728 = vld [vmem:[%s4 + $0x68] sm:$0xff]
        %v729 = vld [vmem:[%s4 + $0x70] sm:$0xff]
        %v730 = vld [vmem:[%s4 + $0x78] sm:$0xff]
        %v731 = vperm.slane %v221, 5
        %732 = vmatpush.msra.mxu0 %v730
        %733 = vmatpush.msra.mxu0 %v729
        %734 = vmatpush.msra.mxu0 %v728
        %735 = vmatpush.msra.mxu0 %v727
        %736 = vmatpush.msra.mxu0 %v726
        %737 = vmatpush.msra.mxu0 %v725
        %738 = vmatpush.msra.mxu0 %v724
        %739 = vmatpush.msra.mxu0 %v723
        %740 = vmatpush.msra.mxu0 %v722
        %741 = vmatpush.msra.mxu0 %v721
        %742 = vmatpush.msra.mxu0 %v720
        %743 = vmatpush.msra.mxu0 %v719
        %744 = vmatpush.msra.mxu0 %v718
        %745 = vmatpush.msra.mxu0 %v717
        %746 = vmatpush.msra.mxu0 %v716
        %747 = vmatpush.msra.mxu0 %v715
        %748 = vmatmul.f32.gmra.mxu0 %v714
        %v749 = vpop.f32.mrf.mxu0
        %v750 = vadd.f32 %v731, %v749
        %751 = vdwg.mxu0
        %v752 = vadd.f32 %v659, %v750
        %753 = vst.msk [vmem:[%s215] sm:$0xff] %vm226, %v752
        %s754 = sand.u32 %s137, 1
        %s755 = scalar_lea.sflag [#allocation3], %s754
        %s756 = sand.u32 %s137, 1
        %s757 = smul.addr %s756, 8
        %s758 = scalar_lea.vmem [#allocation2], %s757
        // Predicated region
        $region41: #{tpu_custom_call.1} parent=39 // pred_check
          %p759 = pneg %p147
        $region42: #{tpu_custom_call.1} parent=39 // pred_check_branch
          %761 = sbr.rel (%p759) target = $region44
        $region43: #{tpu_custom_call.1} parent=39 // pred_region
          %763 = vsyncadd %s755, 0
          %s764 = smul.addr %s19, 8
          %s765 = scalar_lea.hbm %s5, %s764
          %s767 = sshll.u32 %s758, 4
          %s768 = int_to_ptr.vmem [resolvable:$true] %s767
          %s769 = sshll.u32 %s765, 4
          %s770 = int_to_ptr.hbm [resolvable:$true] %s769
          %772 = dma.vmem_to_hbm [thread:$0]  %s768, 128, %s770, %s755
        $region44: #{tpu_custom_call.1} parent=39 // pred_fallthru
          _
      $region40: #{tpu_custom_call.1} parent=5 // pred_fallthru
        _
      %p773 = scmp.le.s32.totalorder 2, %s14
      // Predicated region
      $region45: #{tpu_custom_call.1} parent=5 // pred_check
        %p774 = pneg %p773
      $region46: #{tpu_custom_call.1} parent=5 // pred_check_branch
        %776 = sbr.rel (%p774) target = $region48
      $region47: #{tpu_custom_call.1} parent=5 // pred_region
        %s777 = ssub.s32 %s14, 2
        // Predicated region
        $region49: #{tpu_custom_call.1} parent=47 // pred_check
          %p778 = pneg %p153
        $region50: #{tpu_custom_call.1} parent=47 // pred_check_branch
          %780 = sbr.rel (%p778) target = $region52
        $region51: #{tpu_custom_call.1} parent=47 // pred_region
          %s781 = sand.u32 %s138, 1
          %s782 = scalar_lea.sflag [#allocation3], %s781
          %s783 = sand.u32 %s138, 1
          %s784 = smul.addr %s783, 8
          %s785 = scalar_lea.vmem [#allocation2], %s784
          %787 = dma.done %s782, 128
        $region52: #{tpu_custom_call.1} parent=47 // pred_fallthru
          _
      $region48: #{tpu_custom_call.1} parent=5 // pred_fallthru
        _
    $region6: #{tpu_custom_call.1} parent=1 // loop_footer
      %s18 = sadd.s32 1, %s14
    $region7: #{tpu_custom_call.1} parent=1 // loop_footer_branch
      %13 = sbr.rel target = $region3
    $region8: #{tpu_custom_call.1} parent=1 // loop_exit
      _
    %788 = vsyncpa [#allocation3], 1
    %s789 = scalar_lea.sflag [#allocation3], 1
    %790 = vsyncpa %s789, 1

</llo_original>
